<compile_context>
chip_gen: v7x
topology: tpu7x:2x2x1
jax: 0.10.0
libtpu: 0.0.40
codegen_flags: <defaults>
</compile_context>

<pallas_src>
import functools

import jax
import jax.numpy as jnp
from jax import lax
from jax.experimental import pallas as pl
from jax.experimental.pallas import tpu as pltpu

NUM_LOC = 12                       # TextBoxes++: 4 (rect) + 8 (quad) offsets
_TS_MAX = 256                      # max sublane rows per tile (~1.8 MiB/f32 block)
_N_BISECT = 32                     # bisection steps for hard-negative threshold
_MINING_VMEM_BYTES = 6 * 1024 * 1024   # keep per-box losses on-chip below this


def _round_up(x, m):
    return (x + m - 1) // m * m


# --------------------------------------------------------------------------- #
# Kernel 1: per-box losses + per-tile partial sums
# --------------------------------------------------------------------------- #
def _textbox_loss_kernel(pos_ref, p_ref, t_ref, neg_ref, acc_ref, *,
                         nc, ts, num_boxes):
    """Block views (grid = (batch, d_tile), both axes "parallel"):

      pos_ref : (1, ts, 128)        f32, >0 where the default box is positive
      p_ref   : (1, C, ts, 128)     predictions, channel-major
      t_ref   : (1, C, ts, 128)     targets, channel-major
      neg_ref : (1, ts, 128)   out  conf loss for negatives, -1.0 elsewhere
      acc_ref : (1, 1, 24, 128) out per-tile partials: rows 0-7 positive
                                    smooth-L1, 8-15 positive CE, 16-23 #pos
    """
    f32 = jnp.float32

    # Validity of each box in this tile: covers both the <=8*128-box padding
    # added for the (S, 128) repack and the ragged last tile (garbage rows).
    d_step = pl.program_id(1)
    row = lax.broadcasted_iota(jnp.int32, (ts, 128), 0)
    lane = lax.broadcasted_iota(jnp.int32, (ts, 128), 1)
    box = (d_step * ts + row) * 128 + lane
    valid = box < num_boxes

    pos = pos_ref[0]                                          # (ts, 128)
    posm = jnp.logical_and(valid, pos > 0.0)

    # ---- localization: smooth-L1 (beta=1) summed over the 12 loc channels ----
    loc = jnp.zeros((ts, 128), f32)
    for c in range(NUM_LOC):
        d = p_ref[0, c].astype(f32) - t_ref[0, c].astype(f32)
        ad = jnp.abs(d)
        loc = loc + jnp.where(ad < 1.0, 0.5 * d * d, ad - 0.5)

    # ---- confidence: softmax cross entropy over the class channels ----------
    logits = [p_ref[0, NUM_LOC + c].astype(f32) for c in range(nc)]
    tconf = [t_ref[0, NUM_LOC + c].astype(f32) for c in range(nc)]
    m = logits[0]
    for c in range(1, nc):
        m = jnp.maximum(m, logits[c])
    sumexp = jnp.exp(logits[0] - m)
    for c in range(1, nc):
        sumexp = sumexp + jnp.exp(logits[c] - m)
    lse = m + jnp.log(sumexp)
    ce = tconf[0] * (lse - logits[0])
    for c in range(1, nc):
        ce = ce + tconf[c] * (lse - logits[c])                # (ts, 128), >= 0

    # negatives kept for hard-negative mining; positives / padding marked -1.
    neg_mask = jnp.logical_and(valid, jnp.logical_not(pos > 0.0))
    neg_ref[0] = jnp.where(neg_mask, ce, -1.0)

    # per-tile partial sums; pure-VALU (8,128) accumulation, full-tile stores.
    def part(x):
        return jnp.sum(x.reshape(ts // 8, 8, 128), axis=0)

    acc_ref[0, 0, 0:8, :] = part(jnp.where(posm, loc, 0.0))
    acc_ref[0, 0, 8:16, :] = part(jnp.where(posm, ce, 0.0))
    acc_ref[0, 0, 16:24, :] = part(jnp.where(posm, 1.0, 0.0))


# --------------------------------------------------------------------------- #
# Hard-negative mining: sum of the k largest non-negative entries (no sort)
# --------------------------------------------------------------------------- #
def _sum_topk_nonneg(x, k, n_iters):
    """Sum of the k largest entries of `x` among entries >= 0 (-1 = invalid).

    Monotone bisection on the threshold value; ties at the k-th value are
    handled analytically, so the result matches a sort-based top-k sum.
    """
    f32 = jnp.float32
    x = x.astype(f32)
    k = k.astype(f32)
    valid = x >= 0.0
    hi0 = jnp.max(jnp.where(valid, x, 0.0)) + 1.0
    lo0 = jnp.zeros((), f32)

    def body(_, carry):
        lo, hi = carry
        mid = 0.5 * (lo + hi)
        cnt = jnp.sum(jnp.where(jnp.logical_and(valid, x >= mid), 1.0, 0.0))
        up = cnt >= k                       # >= k values above mid -> raise lo
        return jnp.where(up, mid, lo), jnp.where(up, hi, mid)

    lo, _ = lax.fori_loop(0, n_iters, body, (lo0, hi0))
    kept = jnp.logical_and(valid, x >= lo)
    vk = jnp.min(jnp.where(kept, x, jnp.inf))        # k-th largest value
    above = jnp.logical_and(valid, x > vk)
    cnt_gt = jnp.sum(jnp.where(above, 1.0, 0.0))
    sum_gt = jnp.sum(jnp.where(above, x, 0.0))
    return jnp.where(k > 0.0, sum_gt + (k - cnt_gt) * vk, 0.0)


def _hard_neg_mining_kernel(k_ref, neg_ref, out_ref, *, n_iters):
    # neg_ref: full (B, S, 128) loss map resident in VMEM -> single HBM read.
    s = _sum_topk_nonneg(neg_ref[...], k_ref[0], n_iters)
    out_ref[...] = jnp.full(out_ref.shape, s, jnp.float32)


# --------------------------------------------------------------------------- #
# Wrapper
# --------------------------------------------------------------------------- #
@functools.partial(
    jax.jit,
    static_argnames=("alpha", "neg_factor", "downcast_to_bf16",
                     "inputs_channel_major"))
def textbox_loss(pos_indicator, predicts, targets, alpha=1.0, neg_factor=3,
                 downcast_to_bf16=False, inputs_channel_major=False):
    """JAX/Pallas equivalent of TextBoxLoss.forward -> (conf_loss, loc_loss)."""
    del alpha  # stored but never applied in the reference forward
    f32 = jnp.float32

    if inputs_channel_major:
        B, C, D = predicts.shape          # producer already emits (B, C, D)
        pred_cm, tgt_cm = predicts, targets
    else:
        # TODO(synk): have the box-head producer emit channel-major (B, C, D)
        # so this transpose (one extra HBM pass per tensor) disappears.
        B, D, C = predicts.shape
        pred_cm = jnp.transpose(predicts, (0, 2, 1))
        tgt_cm = jnp.transpose(targets, (0, 2, 1))
    nc = C - NUM_LOC

    if downcast_to_bf16 and pred_cm.dtype == jnp.float32:
        # fuses into the transpose copy; halves kernel HBM reads (math stays f32)
        pred_cm = pred_cm.astype(jnp.bfloat16)
        tgt_cm = tgt_cm.astype(jnp.bfloat16)

    # dtype-legal sublane granule: 8 rows for f32 blocks, 16 for bf16 blocks.
    mult = 16 if pred_cm.dtype == jnp.bfloat16 else 8

    # Pad the box axis only to one granule of 128-lane rows; pick the tile size
    # independently (ragged last tile is masked in-kernel).
    D_pad = _round_up(D, 128 * mult)
    S = D_pad // 128
    ts = max(mult, (min(_TS_MAX, S) // mult) * mult)      # ts <= S, mult-aligned
    grid_d = pl.cdiv(S, ts)

    pos_f = pos_indicator.astype(f32)
    pad = D_pad - D
    if pad:
        pos_f = jnp.pad(pos_f, ((0, 0), (0, pad)))
        pred_cm = jnp.pad(pred_cm, ((0, 0), (0, 0), (0, pad)))
        tgt_cm = jnp.pad(tgt_cm, ((0, 0), (0, 0), (0, pad)))
    pos3 = pos_f.reshape(B, S, 128)                       # free reshapes
    pred4 = pred_cm.reshape(B, C, S, 128)
    tgt4 = tgt_cm.reshape(B, C, S, 128)

    neg_conf, acc = pl.pallas_call(
        functools.partial(_textbox_loss_kernel, nc=nc, ts=ts, num_boxes=D),
        out_shape=(
            jax.ShapeDtypeStruct((B, S, 128), f32),            # per-box neg CE
            jax.ShapeDtypeStruct((B, grid_d, 24, 128), f32),   # per-tile partials
        ),
        grid=(B, grid_d),
        in_specs=[
            pl.BlockSpec((1, ts, 128), lambda b, d: (b, d, 0)),
            pl.BlockSpec((1, C, ts, 128), lambda b, d: (b, 0, d, 0)),
            pl.BlockSpec((1, C, ts, 128), lambda b, d: (b, 0, d, 0)),
        ],
        out_specs=(
            pl.BlockSpec((1, ts, 128), lambda b, d: (b, d, 0)),
            pl.BlockSpec((1, 1, 24, 128), lambda b, d: (b, d, 0, 0)),
        ),
        compiler_params=pltpu.CompilerParams(
            dimension_semantics=("parallel", "parallel"),
            vmem_limit_bytes=32 << 20),
    )(pos3, pred4, tgt4)

    # ---- tiny host-side finalization (3 scalars) ----
    sums = jnp.sum(acc.reshape(B, grid_d, 3, 8, 128), axis=(0, 1, 3, 4))
    loc_sum, pos_conf_sum, n_pos = sums[0], sums[1], sums[2]

    loc_loss = loc_sum / n_pos

    # hard-negative mining over the whole batch (as in the reference loss):
    # k = min(neg_factor * N_pos, N_neg) largest negative CE values.
    n_neg = jnp.float32(B * D) - n_pos
    k = jnp.minimum(jnp.float32(neg_factor) * n_pos, n_neg)

    if neg_conf.size * neg_conf.dtype.itemsize <= _MINING_VMEM_BYTES:
        neg_sum = pl.pallas_call(
            functools.partial(_hard_neg_mining_kernel, n_iters=_N_BISECT),
            out_shape=jax.ShapeDtypeStruct((8, 128), f32),
            in_specs=[
                pl.BlockSpec(memory_space=pltpu.MemorySpace.SMEM),
                pl.BlockSpec(memory_space=pltpu.MemorySpace.VMEM),
            ],
            out_specs=pl.BlockSpec(memory_space=pltpu.MemorySpace.VMEM),
            compiler_params=pltpu.CompilerParams(vmem_limit_bytes=32 << 20),
        )(jnp.reshape(k, (1,)), neg_conf)[0, 0]
    else:
        # huge B*D: same bisection as ~_N_BISECT streaming reductions in XLA
        neg_sum = _sum_topk_nonneg(neg_conf.reshape(-1), k, _N_BISECT)

    conf_loss = (pos_conf_sum + neg_sum) / n_pos
    return conf_loss, loc_loss


if __name__ == "__main__":
    # Small shapes consistent with forward: (batch, dbox, 12 loc + 2 classes).
    # D deliberately not a multiple of 128 to exercise the in-kernel box mask.
    B, D = 2, 200
    NC = 2
    C = NUM_LOC + NC

    key = jax.random.PRNGKey(0)
    k1, k2, k3, k4 = jax.random.split(key, 4)

    pos_indicator = jax.random.bernoulli(k1, p=0.2, shape=(B, D))
    pos_indicator = pos_indicator.at[0, 0].set(True)          # >= 1 positive

    predicts = jax.random.normal(k2, (B, D, C), dtype=jnp.float32)
    tgt_loc = jax.random.normal(k3, (B, D, NUM_LOC), dtype=jnp.float32)
    labels = jax.random.randint(k4, (B, D), 0, NC)
    tgt_conf = jax.nn.one_hot(labels, NC, dtype=jnp.float32)
    targets = jnp.concatenate([tgt_loc, tgt_conf], axis=-1)

    conf_loss, loc_loss = textbox_loss(pos_indicator, predicts, targets)
    jax.block_until_ready((conf_loss, loc_loss))

    # ---- pure-JAX reference (same math, plain sort-based top-k) ----
    posb = pos_indicator
    n_pos = int(jnp.sum(posb))
    d = predicts[..., :NUM_LOC] - targets[..., :NUM_LOC]
    ad = jnp.abs(d)
    sl1 = jnp.sum(jnp.where(ad < 1.0, 0.5 * d * d, ad - 0.5), axis=-1)
    loc_ref = jnp.sum(jnp.where(posb, sl1, 0.0)) / n_pos
    logp = jax.nn.log_softmax(predicts[..., NUM_LOC:], axis=-1)
    ce = -jnp.sum(targets[..., NUM_LOC:] * logp, axis=-1)
    pos_ce = jnp.sum(jnp.where(posb, ce, 0.0))
    neg_vals = jnp.where(posb, -1.0, ce).reshape(-1)
    kk = min(3 * n_pos, B * D - n_pos)
    neg_sum_ref = jnp.sum(jnp.sort(neg_vals)[::-1][:kk])
    conf_ref = (pos_ce + neg_sum_ref) / n_pos

    assert jnp.isfinite(conf_loss) and jnp.isfinite(loc_loss)
    assert jnp.allclose(loc_loss, loc_ref, rtol=1e-4, atol=1e-5), (loc_loss, loc_ref)
    assert jnp.allclose(conf_loss, conf_ref, rtol=1e-4, atol=1e-5), (conf_loss, conf_ref)
    print("KERNEL_OK")
</pallas_src>

<mosaic_0001>
module attributes {stable_mosaic.version = 11 : i64} {
  func.func @_textbox_loss_kernel(%arg0: i32, %arg1: i32, %arg2: memref<1x8x128xf32, #tpu.memory_space<vmem>>, %arg3: memref<1x14x8x128xf32, #tpu.memory_space<vmem>>, %arg4: memref<1x14x8x128xf32, #tpu.memory_space<vmem>>, %arg5: memref<1x8x128xf32, #tpu.memory_space<vmem>>, %arg6: memref<1x1x24x128xf32, #tpu.memory_space<vmem>>) attributes {dimension_semantics = [#tpu.dimension_semantics<parallel>, #tpu.dimension_semantics<parallel>], iteration_bounds = array<i64: 2, 1>, scalar_prefetch = 0 : i64, scratch_operands = 0 : i64, tpu.core_type = #tpu.core_type<tc>, window_params = [{transform_indices = @transform_0, window_bounds = array<i64: 1, 8, 128>}, {transform_indices = @transform_1, window_bounds = array<i64: 1, 14, 8, 128>}, {transform_indices = @transform_2, window_bounds = array<i64: 1, 14, 8, 128>}, {transform_indices = @transform_3, window_bounds = array<i64: 1, 8, 128>}, {transform_indices = @transform_4, window_bounds = array<i64: 1, 1, 24, 128>}]} {
    %0 = tpu.iota {dimensions = array<i32: 0>} : vector<8x128xi32>
    %1 = tpu.iota {dimensions = array<i32: 1>} : vector<8x128xi32>
    %c8_i32 = arith.constant 8 : i32
    %2 = arith.muli %arg1, %c8_i32 : i32
    %3 = vector.broadcast %2 : i32 to vector<8x128xi32>
    %4 = arith.addi %3, %0 : vector<8x128xi32>
    %c128_i32 = arith.constant 128 : i32
    %5 = vector.broadcast %c128_i32 : i32 to vector<8x128xi32>
    %6 = arith.muli %4, %5 : vector<8x128xi32>
    %7 = arith.addi %6, %1 : vector<8x128xi32>
    %c200_i32 = arith.constant 200 : i32
    %8 = vector.broadcast %c200_i32 : i32 to vector<8x128xi32>
    %9 = arith.cmpi slt, %7, %8 : vector<8x128xi32>
    %c0 = arith.constant 0 : index
    %c0_0 = arith.constant 0 : index
    %c0_1 = arith.constant 0 : index
    %10 = vector.load %arg2[%c0, %c0_0, %c0_1] : memref<1x8x128xf32, #tpu.memory_space<vmem>>, vector<1x8x128xf32>
    %11 = vector.shape_cast %10 : vector<1x8x128xf32> to vector<8x128xf32>
    %cst = arith.constant 0.000000e+00 : f32
    %12 = vector.broadcast %cst : f32 to vector<8x128xf32>
    %13 = arith.cmpf ogt, %11, %12 : vector<8x128xf32>
    %14 = arith.andi %9, %13 : vector<8x128xi1>
    %cst_2 = arith.constant 0.000000e+00 : f32
    %15 = vector.broadcast %cst_2 : f32 to vector<8x128xf32>
    %c0_3 = arith.constant 0 : index
    %c0_4 = arith.constant 0 : index
    %c0_5 = arith.constant 0 : index
    %c0_6 = arith.constant 0 : index
    %16 = vector.load %arg3[%c0_3, %c0_4, %c0_5, %c0_6] : memref<1x14x8x128xf32, #tpu.memory_space<vmem>>, vector<1x1x8x128xf32>
    %17 = vector.shape_cast %16 : vector<1x1x8x128xf32> to vector<8x128xf32>
    %c0_7 = arith.constant 0 : index
    %c0_8 = arith.constant 0 : index
    %c0_9 = arith.constant 0 : index
    %c0_10 = arith.constant 0 : index
    %18 = vector.load %arg4[%c0_7, %c0_8, %c0_9, %c0_10] : memref<1x14x8x128xf32, #tpu.memory_space<vmem>>, vector<1x1x8x128xf32>
    %19 = vector.shape_cast %18 : vector<1x1x8x128xf32> to vector<8x128xf32>
    %20 = arith.subf %17, %19 : vector<8x128xf32>
    %21 = math.absf %20 : vector<8x128xf32>
    %cst_11 = arith.constant 1.000000e+00 : f32
    %22 = vector.broadcast %cst_11 : f32 to vector<8x128xf32>
    %23 = arith.cmpf olt, %21, %22 : vector<8x128xf32>
    %cst_12 = arith.constant 5.000000e-01 : f32
    %24 = vector.broadcast %cst_12 : f32 to vector<8x128xf32>
    %25 = arith.mulf %24, %20 : vector<8x128xf32>
    %26 = arith.mulf %25, %20 : vector<8x128xf32>
    %cst_13 = arith.constant 5.000000e-01 : f32
    %27 = vector.broadcast %cst_13 : f32 to vector<8x128xf32>
    %28 = arith.subf %21, %27 : vector<8x128xf32>
    %29 = arith.select %23, %26, %28 : vector<8x128xi1>, vector<8x128xf32>
    %30 = arith.addf %15, %29 : vector<8x128xf32>
    %c0_14 = arith.constant 0 : index
    %c1 = arith.constant 1 : index
    %c0_15 = arith.constant 0 : index
    %c0_16 = arith.constant 0 : index
    %31 = vector.load %arg3[%c0_14, %c1, %c0_15, %c0_16] : memref<1x14x8x128xf32, #tpu.memory_space<vmem>>, vector<1x1x8x128xf32>
    %32 = vector.shape_cast %31 : vector<1x1x8x128xf32> to vector<8x128xf32>
    %c0_17 = arith.constant 0 : index
    %c1_18 = arith.constant 1 : index
    %c0_19 = arith.constant 0 : index
    %c0_20 = arith.constant 0 : index
    %33 = vector.load %arg4[%c0_17, %c1_18, %c0_19, %c0_20] : memref<1x14x8x128xf32, #tpu.memory_space<vmem>>, vector<1x1x8x128xf32>
    %34 = vector.shape_cast %33 : vector<1x1x8x128xf32> to vector<8x128xf32>
    %35 = arith.subf %32, %34 : vector<8x128xf32>
    %36 = math.absf %35 : vector<8x128xf32>
    %cst_21 = arith.constant 1.000000e+00 : f32
    %37 = vector.broadcast %cst_21 : f32 to vector<8x128xf32>
    %38 = arith.cmpf olt, %36, %37 : vector<8x128xf32>
    %cst_22 = arith.constant 5.000000e-01 : f32
    %39 = vector.broadcast %cst_22 : f32 to vector<8x128xf32>
    %40 = arith.mulf %39, %35 : vector<8x128xf32>
    %41 = arith.mulf %40, %35 : vector<8x128xf32>
    %cst_23 = arith.constant 5.000000e-01 : f32
    %42 = vector.broadcast %cst_23 : f32 to vector<8x128xf32>
    %43 = arith.subf %36, %42 : vector<8x128xf32>
    %44 = arith.select %38, %41, %43 : vector<8x128xi1>, vector<8x128xf32>
    %45 = arith.addf %30, %44 : vector<8x128xf32>
    %c0_24 = arith.constant 0 : index
    %c2 = arith.constant 2 : index
    %c0_25 = arith.constant 0 : index
    %c0_26 = arith.constant 0 : index
    %46 = vector.load %arg3[%c0_24, %c2, %c0_25, %c0_26] : memref<1x14x8x128xf32, #tpu.memory_space<vmem>>, vector<1x1x8x128xf32>
    %47 = vector.shape_cast %46 : vector<1x1x8x128xf32> to vector<8x128xf32>
    %c0_27 = arith.constant 0 : index
    %c2_28 = arith.constant 2 : index
    %c0_29 = arith.constant 0 : index
    %c0_30 = arith.constant 0 : index
    %48 = vector.load %arg4[%c0_27, %c2_28, %c0_29, %c0_30] : memref<1x14x8x128xf32, #tpu.memory_space<vmem>>, vector<1x1x8x128xf32>
    %49 = vector.shape_cast %48 : vector<1x1x8x128xf32> to vector<8x128xf32>
    %50 = arith.subf %47, %49 : vector<8x128xf32>
    %51 = math.absf %50 : vector<8x128xf32>
    %cst_31 = arith.constant 1.000000e+00 : f32
    %52 = vector.broadcast %cst_31 : f32 to vector<8x128xf32>
    %53 = arith.cmpf olt, %51, %52 : vector<8x128xf32>
    %cst_32 = arith.constant 5.000000e-01 : f32
    %54 = vector.broadcast %cst_32 : f32 to vector<8x128xf32>
    %55 = arith.mulf %54, %50 : vector<8x128xf32>
    %56 = arith.mulf %55, %50 : vector<8x128xf32>
    %cst_33 = arith.constant 5.000000e-01 : f32
    %57 = vector.broadcast %cst_33 : f32 to vector<8x128xf32>
    %58 = arith.subf %51, %57 : vector<8x128xf32>
    %59 = arith.select %53, %56, %58 : vector<8x128xi1>, vector<8x128xf32>
    %60 = arith.addf %45, %59 : vector<8x128xf32>
    %c0_34 = arith.constant 0 : index
    %c3 = arith.constant 3 : index
    %c0_35 = arith.constant 0 : index
    %c0_36 = arith.constant 0 : index
    %61 = vector.load %arg3[%c0_34, %c3, %c0_35, %c0_36] : memref<1x14x8x128xf32, #tpu.memory_space<vmem>>, vector<1x1x8x128xf32>
    %62 = vector.shape_cast %61 : vector<1x1x8x128xf32> to vector<8x128xf32>
    %c0_37 = arith.constant 0 : index
    %c3_38 = arith.constant 3 : index
    %c0_39 = arith.constant 0 : index
    %c0_40 = arith.constant 0 : index
    %63 = vector.load %arg4[%c0_37, %c3_38, %c0_39, %c0_40] : memref<1x14x8x128xf32, #tpu.memory_space<vmem>>, vector<1x1x8x128xf32>
    %64 = vector.shape_cast %63 : vector<1x1x8x128xf32> to vector<8x128xf32>
    %65 = arith.subf %62, %64 : vector<8x128xf32>
    %66 = math.absf %65 : vector<8x128xf32>
    %cst_41 = arith.constant 1.000000e+00 : f32
    %67 = vector.broadcast %cst_41 : f32 to vector<8x128xf32>
    %68 = arith.cmpf olt, %66, %67 : vector<8x128xf32>
    %cst_42 = arith.constant 5.000000e-01 : f32
    %69 = vector.broadcast %cst_42 : f32 to vector<8x128xf32>
    %70 = arith.mulf %69, %65 : vector<8x128xf32>
    %71 = arith.mulf %70, %65 : vector<8x128xf32>
    %cst_43 = arith.constant 5.000000e-01 : f32
    %72 = vector.broadcast %cst_43 : f32 to vector<8x128xf32>
    %73 = arith.subf %66, %72 : vector<8x128xf32>
    %74 = arith.select %68, %71, %73 : vector<8x128xi1>, vector<8x128xf32>
    %75 = arith.addf %60, %74 : vector<8x128xf32>
    %c0_44 = arith.constant 0 : index
    %c4 = arith.constant 4 : index
    %c0_45 = arith.constant 0 : index
    %c0_46 = arith.constant 0 : index
    %76 = vector.load %arg3[%c0_44, %c4, %c0_45, %c0_46] : memref<1x14x8x128xf32, #tpu.memory_space<vmem>>, vector<1x1x8x128xf32>
    %77 = vector.shape_cast %76 : vector<1x1x8x128xf32> to vector<8x128xf32>
    %c0_47 = arith.constant 0 : index
    %c4_48 = arith.constant 4 : index
    %c0_49 = arith.constant 0 : index
    %c0_50 = arith.constant 0 : index
    %78 = vector.load %arg4[%c0_47, %c4_48, %c0_49, %c0_50] : memref<1x14x8x128xf32, #tpu.memory_space<vmem>>, vector<1x1x8x128xf32>
    %79 = vector.shape_cast %78 : vector<1x1x8x128xf32> to vector<8x128xf32>
    %80 = arith.subf %77, %79 : vector<8x128xf32>
    %81 = math.absf %80 : vector<8x128xf32>
    %cst_51 = arith.constant 1.000000e+00 : f32
    %82 = vector.broadcast %cst_51 : f32 to vector<8x128xf32>
    %83 = arith.cmpf olt, %81, %82 : vector<8x128xf32>
    %cst_52 = arith.constant 5.000000e-01 : f32
    %84 = vector.broadcast %cst_52 : f32 to vector<8x128xf32>
    %85 = arith.mulf %84, %80 : vector<8x128xf32>
    %86 = arith.mulf %85, %80 : vector<8x128xf32>
    %cst_53 = arith.constant 5.000000e-01 : f32
    %87 = vector.broadcast %cst_53 : f32 to vector<8x128xf32>
    %88 = arith.subf %81, %87 : vector<8x128xf32>
    %89 = arith.select %83, %86, %88 : vector<8x128xi1>, vector<8x128xf32>
    %90 = arith.addf %75, %89 : vector<8x128xf32>
    %c0_54 = arith.constant 0 : index
    %c5 = arith.constant 5 : index
    %c0_55 = arith.constant 0 : index
    %c0_56 = arith.constant 0 : index
    %91 = vector.load %arg3[%c0_54, %c5, %c0_55, %c0_56] : memref<1x14x8x128xf32, #tpu.memory_space<vmem>>, vector<1x1x8x128xf32>
    %92 = vector.shape_cast %91 : vector<1x1x8x128xf32> to vector<8x128xf32>
    %c0_57 = arith.constant 0 : index
    %c5_58 = arith.constant 5 : index
    %c0_59 = arith.constant 0 : index
    %c0_60 = arith.constant 0 : index
    %93 = vector.load %arg4[%c0_57, %c5_58, %c0_59, %c0_60] : memref<1x14x8x128xf32, #tpu.memory_space<vmem>>, vector<1x1x8x128xf32>
    %94 = vector.shape_cast %93 : vector<1x1x8x128xf32> to vector<8x128xf32>
    %95 = arith.subf %92, %94 : vector<8x128xf32>
    %96 = math.absf %95 : vector<8x128xf32>
    %cst_61 = arith.constant 1.000000e+00 : f32
    %97 = vector.broadcast %cst_61 : f32 to vector<8x128xf32>
    %98 = arith.cmpf olt, %96, %97 : vector<8x128xf32>
    %cst_62 = arith.constant 5.000000e-01 : f32
    %99 = vector.broadcast %cst_62 : f32 to vector<8x128xf32>
    %100 = arith.mulf %99, %95 : vector<8x128xf32>
    %101 = arith.mulf %100, %95 : vector<8x128xf32>
    %cst_63 = arith.constant 5.000000e-01 : f32
    %102 = vector.broadcast %cst_63 : f32 to vector<8x128xf32>
    %103 = arith.subf %96, %102 : vector<8x128xf32>
    %104 = arith.select %98, %101, %103 : vector<8x128xi1>, vector<8x128xf32>
    %105 = arith.addf %90, %104 : vector<8x128xf32>
    %c0_64 = arith.constant 0 : index
    %c6 = arith.constant 6 : index
    %c0_65 = arith.constant 0 : index
    %c0_66 = arith.constant 0 : index
    %106 = vector.load %arg3[%c0_64, %c6, %c0_65, %c0_66] : memref<1x14x8x128xf32, #tpu.memory_space<vmem>>, vector<1x1x8x128xf32>
    %107 = vector.shape_cast %106 : vector<1x1x8x128xf32> to vector<8x128xf32>
    %c0_67 = arith.constant 0 : index
    %c6_68 = arith.constant 6 : index
    %c0_69 = arith.constant 0 : index
    %c0_70 = arith.constant 0 : index
    %108 = vector.load %arg4[%c0_67, %c6_68, %c0_69, %c0_70] : memref<1x14x8x128xf32, #tpu.memory_space<vmem>>, vector<1x1x8x128xf32>
    %109 = vector.shape_cast %108 : vector<1x1x8x128xf32> to vector<8x128xf32>
    %110 = arith.subf %107, %109 : vector<8x128xf32>
    %111 = math.absf %110 : vector<8x128xf32>
    %cst_71 = arith.constant 1.000000e+00 : f32
    %112 = vector.broadcast %cst_71 : f32 to vector<8x128xf32>
    %113 = arith.cmpf olt, %111, %112 : vector<8x128xf32>
    %cst_72 = arith.constant 5.000000e-01 : f32
    %114 = vector.broadcast %cst_72 : f32 to vector<8x128xf32>
    %115 = arith.mulf %114, %110 : vector<8x128xf32>
    %116 = arith.mulf %115, %110 : vector<8x128xf32>
    %cst_73 = arith.constant 5.000000e-01 : f32
    %117 = vector.broadcast %cst_73 : f32 to vector<8x128xf32>
    %118 = arith.subf %111, %117 : vector<8x128xf32>
    %119 = arith.select %113, %116, %118 : vector<8x128xi1>, vector<8x128xf32>
    %120 = arith.addf %105, %119 : vector<8x128xf32>
    %c0_74 = arith.constant 0 : index
    %c7 = arith.constant 7 : index
    %c0_75 = arith.constant 0 : index
    %c0_76 = arith.constant 0 : index
    %121 = vector.load %arg3[%c0_74, %c7, %c0_75, %c0_76] : memref<1x14x8x128xf32, #tpu.memory_space<vmem>>, vector<1x1x8x128xf32>
    %122 = vector.shape_cast %121 : vector<1x1x8x128xf32> to vector<8x128xf32>
    %c0_77 = arith.constant 0 : index
    %c7_78 = arith.constant 7 : index
    %c0_79 = arith.constant 0 : index
    %c0_80 = arith.constant 0 : index
    %123 = vector.load %arg4[%c0_77, %c7_78, %c0_79, %c0_80] : memref<1x14x8x128xf32, #tpu.memory_space<vmem>>, vector<1x1x8x128xf32>
    %124 = vector.shape_cast %123 : vector<1x1x8x128xf32> to vector<8x128xf32>
    %125 = arith.subf %122, %124 : vector<8x128xf32>
    %126 = math.absf %125 : vector<8x128xf32>
    %cst_81 = arith.constant 1.000000e+00 : f32
    %127 = vector.broadcast %cst_81 : f32 to vector<8x128xf32>
    %128 = arith.cmpf olt, %126, %127 : vector<8x128xf32>
    %cst_82 = arith.constant 5.000000e-01 : f32
    %129 = vector.broadcast %cst_82 : f32 to vector<8x128xf32>
    %130 = arith.mulf %129, %125 : vector<8x128xf32>
    %131 = arith.mulf %130, %125 : vector<8x128xf32>
    %cst_83 = arith.constant 5.000000e-01 : f32
    %132 = vector.broadcast %cst_83 : f32 to vector<8x128xf32>
    %133 = arith.subf %126, %132 : vector<8x128xf32>
    %134 = arith.select %128, %131, %133 : vector<8x128xi1>, vector<8x128xf32>
    %135 = arith.addf %120, %134 : vector<8x128xf32>
    %c0_84 = arith.constant 0 : index
    %c8 = arith.constant 8 : index
    %c0_85 = arith.constant 0 : index
    %c0_86 = arith.constant 0 : index
    %136 = vector.load %arg3[%c0_84, %c8, %c0_85, %c0_86] : memref<1x14x8x128xf32, #tpu.memory_space<vmem>>, vector<1x1x8x128xf32>
    %137 = vector.shape_cast %136 : vector<1x1x8x128xf32> to vector<8x128xf32>
    %c0_87 = arith.constant 0 : index
    %c8_88 = arith.constant 8 : index
    %c0_89 = arith.constant 0 : index
    %c0_90 = arith.constant 0 : index
    %138 = vector.load %arg4[%c0_87, %c8_88, %c0_89, %c0_90] : memref<1x14x8x128xf32, #tpu.memory_space<vmem>>, vector<1x1x8x128xf32>
    %139 = vector.shape_cast %138 : vector<1x1x8x128xf32> to vector<8x128xf32>
    %140 = arith.subf %137, %139 : vector<8x128xf32>
    %141 = math.absf %140 : vector<8x128xf32>
    %cst_91 = arith.constant 1.000000e+00 : f32
    %142 = vector.broadcast %cst_91 : f32 to vector<8x128xf32>
    %143 = arith.cmpf olt, %141, %142 : vector<8x128xf32>
    %cst_92 = arith.constant 5.000000e-01 : f32
    %144 = vector.broadcast %cst_92 : f32 to vector<8x128xf32>
    %145 = arith.mulf %144, %140 : vector<8x128xf32>
    %146 = arith.mulf %145, %140 : vector<8x128xf32>
    %cst_93 = arith.constant 5.000000e-01 : f32
    %147 = vector.broadcast %cst_93 : f32 to vector<8x128xf32>
    %148 = arith.subf %141, %147 : vector<8x128xf32>
    %149 = arith.select %143, %146, %148 : vector<8x128xi1>, vector<8x128xf32>
    %150 = arith.addf %135, %149 : vector<8x128xf32>
    %c0_94 = arith.constant 0 : index
    %c9 = arith.constant 9 : index
    %c0_95 = arith.constant 0 : index
    %c0_96 = arith.constant 0 : index
    %151 = vector.load %arg3[%c0_94, %c9, %c0_95, %c0_96] : memref<1x14x8x128xf32, #tpu.memory_space<vmem>>, vector<1x1x8x128xf32>
    %152 = vector.shape_cast %151 : vector<1x1x8x128xf32> to vector<8x128xf32>
    %c0_97 = arith.constant 0 : index
    %c9_98 = arith.constant 9 : index
    %c0_99 = arith.constant 0 : index
    %c0_100 = arith.constant 0 : index
    %153 = vector.load %arg4[%c0_97, %c9_98, %c0_99, %c0_100] : memref<1x14x8x128xf32, #tpu.memory_space<vmem>>, vector<1x1x8x128xf32>
    %154 = vector.shape_cast %153 : vector<1x1x8x128xf32> to vector<8x128xf32>
    %155 = arith.subf %152, %154 : vector<8x128xf32>
    %156 = math.absf %155 : vector<8x128xf32>
    %cst_101 = arith.constant 1.000000e+00 : f32
    %157 = vector.broadcast %cst_101 : f32 to vector<8x128xf32>
    %158 = arith.cmpf olt, %156, %157 : vector<8x128xf32>
    %cst_102 = arith.constant 5.000000e-01 : f32
    %159 = vector.broadcast %cst_102 : f32 to vector<8x128xf32>
    %160 = arith.mulf %159, %155 : vector<8x128xf32>
    %161 = arith.mulf %160, %155 : vector<8x128xf32>
    %cst_103 = arith.constant 5.000000e-01 : f32
    %162 = vector.broadcast %cst_103 : f32 to vector<8x128xf32>
    %163 = arith.subf %156, %162 : vector<8x128xf32>
    %164 = arith.select %158, %161, %163 : vector<8x128xi1>, vector<8x128xf32>
    %165 = arith.addf %150, %164 : vector<8x128xf32>
    %c0_104 = arith.constant 0 : index
    %c10 = arith.constant 10 : index
    %c0_105 = arith.constant 0 : index
    %c0_106 = arith.constant 0 : index
    %166 = vector.load %arg3[%c0_104, %c10, %c0_105, %c0_106] : memref<1x14x8x128xf32, #tpu.memory_space<vmem>>, vector<1x1x8x128xf32>
    %167 = vector.shape_cast %166 : vector<1x1x8x128xf32> to vector<8x128xf32>
    %c0_107 = arith.constant 0 : index
    %c10_108 = arith.constant 10 : index
    %c0_109 = arith.constant 0 : index
    %c0_110 = arith.constant 0 : index
    %168 = vector.load %arg4[%c0_107, %c10_108, %c0_109, %c0_110] : memref<1x14x8x128xf32, #tpu.memory_space<vmem>>, vector<1x1x8x128xf32>
    %169 = vector.shape_cast %168 : vector<1x1x8x128xf32> to vector<8x128xf32>
    %170 = arith.subf %167, %169 : vector<8x128xf32>
    %171 = math.absf %170 : vector<8x128xf32>
    %cst_111 = arith.constant 1.000000e+00 : f32
    %172 = vector.broadcast %cst_111 : f32 to vector<8x128xf32>
    %173 = arith.cmpf olt, %171, %172 : vector<8x128xf32>
    %cst_112 = arith.constant 5.000000e-01 : f32
    %174 = vector.broadcast %cst_112 : f32 to vector<8x128xf32>
    %175 = arith.mulf %174, %170 : vector<8x128xf32>
    %176 = arith.mulf %175, %170 : vector<8x128xf32>
    %cst_113 = arith.constant 5.000000e-01 : f32
    %177 = vector.broadcast %cst_113 : f32 to vector<8x128xf32>
    %178 = arith.subf %171, %177 : vector<8x128xf32>
    %179 = arith.select %173, %176, %178 : vector<8x128xi1>, vector<8x128xf32>
    %180 = arith.addf %165, %179 : vector<8x128xf32>
    %c0_114 = arith.constant 0 : index
    %c11 = arith.constant 11 : index
    %c0_115 = arith.constant 0 : index
    %c0_116 = arith.constant 0 : index
    %181 = vector.load %arg3[%c0_114, %c11, %c0_115, %c0_116] : memref<1x14x8x128xf32, #tpu.memory_space<vmem>>, vector<1x1x8x128xf32>
    %182 = vector.shape_cast %181 : vector<1x1x8x128xf32> to vector<8x128xf32>
    %c0_117 = arith.constant 0 : index
    %c11_118 = arith.constant 11 : index
    %c0_119 = arith.constant 0 : index
    %c0_120 = arith.constant 0 : index
    %183 = vector.load %arg4[%c0_117, %c11_118, %c0_119, %c0_120] : memref<1x14x8x128xf32, #tpu.memory_space<vmem>>, vector<1x1x8x128xf32>
    %184 = vector.shape_cast %183 : vector<1x1x8x128xf32> to vector<8x128xf32>
    %185 = arith.subf %182, %184 : vector<8x128xf32>
    %186 = math.absf %185 : vector<8x128xf32>
    %cst_121 = arith.constant 1.000000e+00 : f32
    %187 = vector.broadcast %cst_121 : f32 to vector<8x128xf32>
    %188 = arith.cmpf olt, %186, %187 : vector<8x128xf32>
    %cst_122 = arith.constant 5.000000e-01 : f32
    %189 = vector.broadcast %cst_122 : f32 to vector<8x128xf32>
    %190 = arith.mulf %189, %185 : vector<8x128xf32>
    %191 = arith.mulf %190, %185 : vector<8x128xf32>
    %cst_123 = arith.constant 5.000000e-01 : f32
    %192 = vector.broadcast %cst_123 : f32 to vector<8x128xf32>
    %193 = arith.subf %186, %192 : vector<8x128xf32>
    %194 = arith.select %188, %191, %193 : vector<8x128xi1>, vector<8x128xf32>
    %195 = arith.addf %180, %194 : vector<8x128xf32>
    %c0_124 = arith.constant 0 : index
    %c12 = arith.constant 12 : index
    %c0_125 = arith.constant 0 : index
    %c0_126 = arith.constant 0 : index
    %196 = vector.load %arg3[%c0_124, %c12, %c0_125, %c0_126] : memref<1x14x8x128xf32, #tpu.memory_space<vmem>>, vector<1x1x8x128xf32>
    %197 = vector.shape_cast %196 : vector<1x1x8x128xf32> to vector<8x128xf32>
    %c0_127 = arith.constant 0 : index
    %c13 = arith.constant 13 : index
    %c0_128 = arith.constant 0 : index
    %c0_129 = arith.constant 0 : index
    %198 = vector.load %arg3[%c0_127, %c13, %c0_128, %c0_129] : memref<1x14x8x128xf32, #tpu.memory_space<vmem>>, vector<1x1x8x128xf32>
    %199 = vector.shape_cast %198 : vector<1x1x8x128xf32> to vector<8x128xf32>
    %c0_130 = arith.constant 0 : index
    %c12_131 = arith.constant 12 : index
    %c0_132 = arith.constant 0 : index
    %c0_133 = arith.constant 0 : index
    %200 = vector.load %arg4[%c0_130, %c12_131, %c0_132, %c0_133] : memref<1x14x8x128xf32, #tpu.memory_space<vmem>>, vector<1x1x8x128xf32>
    %201 = vector.shape_cast %200 : vector<1x1x8x128xf32> to vector<8x128xf32>
    %c0_134 = arith.constant 0 : index
    %c13_135 = arith.constant 13 : index
    %c0_136 = arith.constant 0 : index
    %c0_137 = arith.constant 0 : index
    %202 = vector.load %arg4[%c0_134, %c13_135, %c0_136, %c0_137] : memref<1x14x8x128xf32, #tpu.memory_space<vmem>>, vector<1x1x8x128xf32>
    %203 = vector.shape_cast %202 : vector<1x1x8x128xf32> to vector<8x128xf32>
    %204 = arith.maximumf %197, %199 : vector<8x128xf32>
    %205 = arith.subf %197, %204 : vector<8x128xf32>
    %206 = math.exp %205 : vector<8x128xf32>
    %207 = arith.subf %199, %204 : vector<8x128xf32>
    %208 = math.exp %207 : vector<8x128xf32>
    %209 = arith.addf %206, %208 : vector<8x128xf32>
    %210 = math.log %209 : vector<8x128xf32>
    %211 = arith.addf %204, %210 : vector<8x128xf32>
    %212 = arith.subf %211, %197 : vector<8x128xf32>
    %213 = arith.mulf %201, %212 : vector<8x128xf32>
    %214 = arith.subf %211, %199 : vector<8x128xf32>
    %215 = arith.mulf %203, %214 : vector<8x128xf32>
    %216 = arith.addf %213, %215 : vector<8x128xf32>
    %cst_138 = arith.constant 0.000000e+00 : f32
    %217 = vector.broadcast %cst_138 : f32 to vector<8x128xf32>
    %218 = arith.cmpf ogt, %11, %217 : vector<8x128xf32>
    %cst_139 = arith.constant dense<true> : vector<8x128xi1>
    %219 = arith.xori %218, %cst_139 : vector<8x128xi1>
    %220 = arith.andi %9, %219 : vector<8x128xi1>
    %cst_140 = arith.constant -1.000000e+00 : f32
    %221 = vector.broadcast %cst_140 : f32 to vector<8x128xf32>
    %222 = arith.select %220, %216, %221 : vector<8x128xi1>, vector<8x128xf32>
    %c0_141 = arith.constant 0 : index
    %c0_142 = arith.constant 0 : index
    %c0_143 = arith.constant 0 : index
    %223 = vector.load %arg5[%c0_141, %c0_142, %c0_143] : memref<1x8x128xf32, #tpu.memory_space<vmem>>, vector<1x8x128xf32>
    %224 = vector.shape_cast %223 : vector<1x8x128xf32> to vector<8x128xf32>
    %225 = vector.shape_cast %222 : vector<8x128xf32> to vector<1x8x128xf32>
    tpu.vector_store %arg5[%c0_141, %c0_142, %c0_143], %225 {strides = array<i32>} : memref<1x8x128xf32, #tpu.memory_space<vmem>>, vector<1x8x128xf32>,
    %cst_144 = arith.constant 0.000000e+00 : f32
    %226 = vector.broadcast %cst_144 : f32 to vector<8x128xf32>
    %227 = arith.select %14, %195, %226 : vector<8x128xi1>, vector<8x128xf32>
    %228 = vector.shape_cast %227 : vector<8x128xf32> to vector<1x8x128xf32>
    %cst_145 = arith.constant dense<0.000000e+00> : vector<8x128xf32>
    %229 = vector.multi_reduction <add>, %228, %cst_145 [0] : vector<1x8x128xf32> to vector<8x128xf32>
    %c0_146 = arith.constant 0 : index
    %c0_147 = arith.constant 0 : index
    %c0_148 = arith.constant 0 : index
    %c0_149 = arith.constant 0 : index
    %230 = vector.load %arg6[%c0_146, %c0_147, %c0_148, %c0_149] : memref<1x1x24x128xf32, #tpu.memory_space<vmem>>, vector<1x1x8x128xf32>
    %231 = vector.shape_cast %230 : vector<1x1x8x128xf32> to vector<8x128xf32>
    %232 = vector.shape_cast %229 : vector<8x128xf32> to vector<1x1x8x128xf32>
    tpu.vector_store %arg6[%c0_146, %c0_147, %c0_148, %c0_149], %232 {strides = array<i32>} : memref<1x1x24x128xf32, #tpu.memory_space<vmem>>, vector<1x1x8x128xf32>,
    %cst_150 = arith.constant 0.000000e+00 : f32
    %233 = vector.broadcast %cst_150 : f32 to vector<8x128xf32>
    %234 = arith.select %14, %216, %233 : vector<8x128xi1>, vector<8x128xf32>
    %235 = vector.shape_cast %234 : vector<8x128xf32> to vector<1x8x128xf32>
    %cst_151 = arith.constant dense<0.000000e+00> : vector<8x128xf32>
    %236 = vector.multi_reduction <add>, %235, %cst_151 [0] : vector<1x8x128xf32> to vector<8x128xf32>
    %c0_152 = arith.constant 0 : index
    %c0_153 = arith.constant 0 : index
    %c8_154 = arith.constant 8 : index
    %c0_155 = arith.constant 0 : index
    %237 = vector.load %arg6[%c0_152, %c0_153, %c8_154, %c0_155] : memref<1x1x24x128xf32, #tpu.memory_space<vmem>>, vector<1x1x8x128xf32>
    %238 = vector.shape_cast %237 : vector<1x1x8x128xf32> to vector<8x128xf32>
    %239 = vector.shape_cast %236 : vector<8x128xf32> to vector<1x1x8x128xf32>
    tpu.vector_store %arg6[%c0_152, %c0_153, %c8_154, %c0_155], %239 {strides = array<i32>} : memref<1x1x24x128xf32, #tpu.memory_space<vmem>>, vector<1x1x8x128xf32>,
    %cst_156 = arith.constant 1.000000e+00 : f32
    %cst_157 = arith.constant 0.000000e+00 : f32
    %240 = vector.broadcast %cst_156 : f32 to vector<8x128xf32>
    %241 = vector.broadcast %cst_157 : f32 to vector<8x128xf32>
    %242 = arith.select %14, %240, %241 : vector<8x128xi1>, vector<8x128xf32>
    %243 = vector.shape_cast %242 : vector<8x128xf32> to vector<1x8x128xf32>
    %cst_158 = arith.constant dense<0.000000e+00> : vector<8x128xf32>
    %244 = vector.multi_reduction <add>, %243, %cst_158 [0] : vector<1x8x128xf32> to vector<8x128xf32>
    %c0_159 = arith.constant 0 : index
    %c0_160 = arith.constant 0 : index
    %c16 = arith.constant 16 : index
    %c0_161 = arith.constant 0 : index
    %245 = vector.load %arg6[%c0_159, %c0_160, %c16, %c0_161] : memref<1x1x24x128xf32, #tpu.memory_space<vmem>>, vector<1x1x8x128xf32>
    %246 = vector.shape_cast %245 : vector<1x1x8x128xf32> to vector<8x128xf32>
    %247 = vector.shape_cast %244 : vector<8x128xf32> to vector<1x1x8x128xf32>
    tpu.vector_store %arg6[%c0_159, %c0_160, %c16, %c0_161], %247 {strides = array<i32>} : memref<1x1x24x128xf32, #tpu.memory_space<vmem>>, vector<1x1x8x128xf32>,
    return
  }
  func.func @transform_0(%arg0: i32, %arg1: i32) -> (i32, i32, i32) {
    %c0_i32 = arith.constant 0 : i32
    %c0_i32_0 = arith.constant 0 : i32
    return %arg0, %arg1, %c0_i32 : i32, i32, i32
  }
  func.func @transform_1(%arg0: i32, %arg1: i32) -> (i32, i32, i32, i32) {
    %c0_i32 = arith.constant 0 : i32
    %c0_i32_0 = arith.constant 0 : i32
    %c0_i32_1 = arith.constant 0 : i32
    return %arg0, %c0_i32, %arg1, %c0_i32_0 : i32, i32, i32, i32
  }
  func.func @transform_2(%arg0: i32, %arg1: i32) -> (i32, i32, i32, i32) {
    %c0_i32 = arith.constant 0 : i32
    %c0_i32_0 = arith.constant 0 : i32
    %c0_i32_1 = arith.constant 0 : i32
    return %arg0, %c0_i32, %arg1, %c0_i32_0 : i32, i32, i32, i32
  }
  func.func @transform_3(%arg0: i32, %arg1: i32) -> (i32, i32, i32) {
    %c0_i32 = arith.constant 0 : i32
    %c0_i32_0 = arith.constant 0 : i32
    return %arg0, %arg1, %c0_i32 : i32, i32, i32
  }
  func.func @transform_4(%arg0: i32, %arg1: i32) -> (i32, i32, i32, i32) {
    %c0_i32 = arith.constant 0 : i32
    %c0_i32_0 = arith.constant 0 : i32
    %c0_i32_1 = arith.constant 0 : i32
    return %arg0, %arg1, %c0_i32, %c0_i32_0 : i32, i32, i32, i32
  }
}

module attributes {stable_mosaic.version = 11 : i64} {
  func.func @_hard_neg_mining_kernel(%arg0: memref<1xf32, #tpu.memory_space<smem>>, %arg1: memref<2x8x128xf32, #tpu.memory_space<vmem>>, %arg2: memref<8x128xf32, #tpu.memory_space<vmem>>) attributes {dimension_semantics = [], scalar_prefetch = 0 : i64, scratch_operands = 0 : i64, tpu.core_type = #tpu.core_type<tc>} {
    %c0 = arith.constant 0 : index
    %c0_0 = arith.constant 0 : index
    %c0_1 = arith.constant 0 : index
    %0 = vector.load %arg1[%c0, %c0_0, %c0_1] : memref<2x8x128xf32, #tpu.memory_space<vmem>>, vector<2x8x128xf32>
    %c0_2 = arith.constant 0 : index
    %1 = memref.load %arg0[%c0_2] : memref<1xf32, #tpu.memory_space<smem>>
    %cst = arith.constant 0.000000e+00 : f32
    %2 = vector.broadcast %cst : f32 to vector<2x8x128xf32>
    %3 = arith.cmpf oge, %0, %2 : vector<2x8x128xf32>
    %cst_3 = arith.constant 0.000000e+00 : f32
    %4 = vector.broadcast %cst_3 : f32 to vector<2x8x128xf32>
    %5 = arith.select %3, %0, %4 : vector<2x8x128xi1>, vector<2x8x128xf32>
    %6 = vector.shape_cast %5 : vector<2x8x128xf32> to vector<1x2x8x128xf32>
    %cst_4 = arith.constant dense<0xFF800000> : vector<1xf32>
    %7 = vector.multi_reduction <maximumf>, %6, %cst_4 [1, 2, 3] : vector<1x2x8x128xf32> to vector<1xf32>
    %8 = vector.shape_cast %7 : vector<1xf32> to vector<1x1x1x1xf32>
    %9 = vector.extract %8[0, 0, 0, 0] : f32 from vector<1x1x1x1xf32>
    %cst_5 = arith.constant 1.000000e+00 : f32
    %10 = arith.addf %9, %cst_5 : f32
    %cst_6 = arith.constant 0.000000e+00 : f32
    %c0_i32 = arith.constant 0 : i32
    %c32_i32 = arith.constant 32 : i32
    %11 = arith.addi %c0_i32, %c32_i32 : i32
    %c1_i32 = arith.constant 1 : i32
    %12:2 = scf.for %arg3 = %c0_i32 to %11 step %c1_i32 iter_args(%arg4 = %cst_6, %arg5 = %10) -> (f32, f32)  : i32 {
      %45 = arith.addf %arg4, %arg5 : f32
      %cst_18 = arith.constant 5.000000e-01 : f32
      %46 = arith.mulf %cst_18, %45 : f32
      %47 = vector.broadcast %46 : f32 to vector<2x8x128xf32>
      %48 = arith.cmpf oge, %0, %47 : vector<2x8x128xf32>
      %49 = arith.andi %3, %48 : vector<2x8x128xi1>
      %cst_19 = arith.constant 1.000000e+00 : f32
      %cst_20 = arith.constant 0.000000e+00 : f32
      %50 = vector.broadcast %cst_19 : f32 to vector<2x8x128xf32>
      %51 = vector.broadcast %cst_20 : f32 to vector<2x8x128xf32>
      %52 = arith.select %49, %50, %51 : vector<2x8x128xi1>, vector<2x8x128xf32>
      %53 = vector.shape_cast %52 : vector<2x8x128xf32> to vector<1x2x8x128xf32>
      %cst_21 = arith.constant dense<0.000000e+00> : vector<1xf32>
      %54 = vector.multi_reduction <add>, %53, %cst_21 [1, 2, 3] : vector<1x2x8x128xf32> to vector<1xf32>
      %55 = vector.shape_cast %54 : vector<1xf32> to vector<1x1x1x1xf32>
      %56 = vector.extract %55[0, 0, 0, 0] : f32 from vector<1x1x1x1xf32>
      %57 = arith.cmpf oge, %56, %1 : f32
      %58 = arith.select %57, %46, %arg4 : f32
      %59 = arith.select %57, %arg5, %46 : f32
      scf.yield %58, %59 : f32, f32
    }
    %13 = vector.broadcast %12#0 : f32 to vector<2x8x128xf32>
    %14 = arith.cmpf oge, %0, %13 : vector<2x8x128xf32>
    %15 = arith.andi %3, %14 : vector<2x8x128xi1>
    %cst_7 = arith.constant 0x7F800000 : f32
    %16 = vector.broadcast %cst_7 : f32 to vector<2x8x128xf32>
    %17 = arith.select %15, %0, %16 : vector<2x8x128xi1>, vector<2x8x128xf32>
    %18 = vector.shape_cast %17 : vector<2x8x128xf32> to vector<1x2x8x128xf32>
    %cst_8 = arith.constant dense<0x7F800000> : vector<1xf32>
    %19 = vector.multi_reduction <minimumf>, %18, %cst_8 [1, 2, 3] : vector<1x2x8x128xf32> to vector<1xf32>
    %20 = vector.shape_cast %19 : vector<1xf32> to vector<1x1x1x1xf32>
    %21 = vector.extract %20[0, 0, 0, 0] : f32 from vector<1x1x1x1xf32>
    %22 = vector.broadcast %21 : f32 to vector<2x8x128xf32>
    %23 = arith.cmpf ogt, %0, %22 : vector<2x8x128xf32>
    %24 = arith.andi %3, %23 : vector<2x8x128xi1>
    %cst_9 = arith.constant 1.000000e+00 : f32
    %cst_10 = arith.constant 0.000000e+00 : f32
    %25 = vector.broadcast %cst_9 : f32 to vector<2x8x128xf32>
    %26 = vector.broadcast %cst_10 : f32 to vector<2x8x128xf32>
    %27 = arith.select %24, %25, %26 : vector<2x8x128xi1>, vector<2x8x128xf32>
    %28 = vector.shape_cast %27 : vector<2x8x128xf32> to vector<1x2x8x128xf32>
    %cst_11 = arith.constant dense<0.000000e+00> : vector<1xf32>
    %29 = vector.multi_reduction <add>, %28, %cst_11 [1, 2, 3] : vector<1x2x8x128xf32> to vector<1xf32>
    %30 = vector.shape_cast %29 : vector<1xf32> to vector<1x1x1x1xf32>
    %31 = vector.extract %30[0, 0, 0, 0] : f32 from vector<1x1x1x1xf32>
    %cst_12 = arith.constant 0.000000e+00 : f32
    %32 = vector.broadcast %cst_12 : f32 to vector<2x8x128xf32>
    %33 = arith.select %24, %0, %32 : vector<2x8x128xi1>, vector<2x8x128xf32>
    %34 = vector.shape_cast %33 : vector<2x8x128xf32> to vector<1x2x8x128xf32>
    %cst_13 = arith.constant dense<0.000000e+00> : vector<1xf32>
    %35 = vector.multi_reduction <add>, %34, %cst_13 [1, 2, 3] : vector<1x2x8x128xf32> to vector<1xf32>
    %36 = vector.shape_cast %35 : vector<1xf32> to vector<1x1x1x1xf32>
    %37 = vector.extract %36[0, 0, 0, 0] : f32 from vector<1x1x1x1xf32>
    %cst_14 = arith.constant 0.000000e+00 : f32
    %38 = arith.cmpf ogt, %1, %cst_14 : f32
    %39 = arith.subf %1, %31 : f32
    %40 = arith.mulf %39, %21 : f32
    %41 = arith.addf %37, %40 : f32
    %cst_15 = arith.constant 0.000000e+00 : f32
    %42 = arith.select %38, %41, %cst_15 : f32
    %43 = vector.broadcast %42 : f32 to vector<8x128xf32>
    %c0_16 = arith.constant 0 : index
    %c0_17 = arith.constant 0 : index
    %44 = vector.load %arg2[%c0_16, %c0_17] : memref<8x128xf32, #tpu.memory_space<vmem>>, vector<8x128xf32>
    tpu.vector_store %arg2[%c0_16, %c0_17], %43 {strides = array<i32>} : memref<8x128xf32, #tpu.memory_space<vmem>>, vector<8x128xf32>,
    return
  }
}

</mosaic_0001>

<llo_original>
// kernel: textbox_loss.3
$region0: #{textbox_loss.3}
  #allocation0 [shape = 'u32[]', space=smem, size = 0x4, offset = 0x4, fixed_abs, tag = 'smem constant byte address 0x4 - core index']
  #allocation1 [shape = 'u32[144,128]{1,0:T(1,128)}', space=vmem, size = 0x12000, scoped, tag = 'internal scratch']
  #allocation2 [shape = 'f32[1]{0:T(128)S(6)}', space=smem, size = 0x200, scoped, tag = 'scoped memory for textbox_loss.3']
  %s0 = inlined_call_operand.<no memory space> [shape: f32[1], index: 0, kind: input, shape index: {}]
  %s1 = inlined_call_operand.vmem [shape: f32[2,8,128], index: 1, kind: input, shape index: {}]
  %s2 = inlined_call_operand.vmem [shape: f32[8,128], index: 2, kind: output, shape index: {}]
  %s3 = sld [smem:[#allocation0]]
  $region25: #{textbox_loss.3} parent=0
    _
  %s5 = ssub.s32 1, %s3
  %s6 = scalar_select 0, %s5, %s3
  %7 = sst [smem:[#allocation2]] %s0
  // Predicated region
  $region2: #{textbox_loss.3} parent=0 // pred_check
    _
  $region3: #{textbox_loss.3} parent=0 // pred_check_branch
    %9 = sbr.rel (0) target = $region5
  $region4: #{textbox_loss.3} parent=0 // pred_region
    _
  $region5: #{textbox_loss.3} parent=0 // pred_fallthru
    _
  // Predicated region
  $region6: #{textbox_loss.3} parent=0 // pred_check
    _
  $region7: #{textbox_loss.3} parent=0 // pred_check_branch
    %11 = sbr.rel (0) target = $region9
  $region8: #{textbox_loss.3} parent=0 // pred_region
    _
  $region9: #{textbox_loss.3} parent=0 // pred_fallthru
    _
  %v12 = vld [vmem:[%s1] sm:$0xff]
  %v13 = vld [vmem:[%s1 + $0x8] sm:$0xff]
  %s14 = sld [smem:[#allocation2]]
  %vm15 = vcmp.ge.f32.partialorder %v12, 0.0
  %vm16 = vcmp.ge.f32.partialorder %v13, 0.0
  %v17 = vsel %vm15, %v12, 0.0
  %v18 = vsel %vm16, %v13, 0.0
  %v19 = vmax.f32 %v17, %v18
  %20 = vmax.xlane.f32.xlu0 %v19
  %v21 = vpop.xlane.xlu0 %20
  %v22 = vrot.slane %v21, 4
  %v23 = vmax.f32 %v21, %v22
  %v24 = vrot.slane %v23, 2
  %v25 = vmax.f32 %v23, %v24
  %v26 = vrot.slane %v25, 1
  %v27 = vmax.f32 %v25, %v26
  %s28 = vtos %v27
  %s29 = sadd.f32 %s28, 1.0
  loop: start=0, step=1, limit=32
  $region10: #{textbox_loss.3} parent=0 // loop_pre_header
    _
  $region11: #{textbox_loss.3} parent=0 // loop_header
    %s31 = sphi 0, %s35
    %p32 = scmp.ge.s32.totalorder %s31, 32
    %s36 = sphi 0.0, %s58
    %s37 = sphi %s29, %s59
  $region12: #{textbox_loss.3} parent=0 // loop_header_branch
    %34 = sbr.rel (%p32) target = $region16
  $region13: #{textbox_loss.3} parent=0 // loop_body
    %s38 = sadd.f32 %s36, %s37
    %s39 = smul.f32 %s38, 0.5
    %v40 = vstv %s39
    %vm41 = vcmp.ge.f32.partialorder %v12, %v40
    %vm42 = vcmp.ge.f32.partialorder %v13, %v40
    %vm43 = vmand %vm15, %vm41
    %vm44 = vmand %vm16, %vm42
    %v45 = vsel %vm43, 1.0, 0.0
    %v46 = vsel %vm44, 1.0, 0.0
    %v47 = vadd.f32 %v45, %v46
    %48 = vadd.xlane.f32.xlu0 %v47
    %v49 = vpop.xlane.xlu0 %48
    %v50 = vrot.slane %v49, 4
    %v51 = vadd.f32 %v49, %v50
    %v52 = vrot.slane %v51, 2
    %v53 = vadd.f32 %v51, %v52
    %v54 = vrot.slane %v53, 1
    %v55 = vadd.f32 %v53, %v54
    %s56 = vtos %v55
    %p57 = scmp.ge.f32.partialorder %s56, %s14
    %s58 = scalar_select %p57, %s39, %s36
    %s59 = scalar_select %p57, %s37, %s39
  $region14: #{textbox_loss.3} parent=0 // loop_footer
    %s35 = sadd.s32 1, %s31
  $region15: #{textbox_loss.3} parent=0 // loop_footer_branch
    %30 = sbr.rel target = $region11
  $region16: #{textbox_loss.3} parent=0 // loop_exit
    _
  %v60 = vstv %s36
  %vm61 = vcmp.ge.f32.partialorder %v12, %v60
  %vm62 = vcmp.ge.f32.partialorder %v13, %v60
  %vm63 = vmand %vm15, %vm61
  %vm64 = vmand %vm16, %vm62
  %v65 = vsel %vm63, %v12, inf
  %v66 = vsel %vm64, %v13, inf
  %v67 = vmin.f32 %v65, %v66
  %68 = vmin.xlane.f32.xlu0 %v67
  %v69 = vpop.xlane.xlu0 %68
  %v70 = vrot.slane %v69, 4
  %v71 = vmin.f32 %v69, %v70
  %v72 = vrot.slane %v71, 2
  %v73 = vmin.f32 %v71, %v72
  %v74 = vrot.slane %v73, 1
  %v75 = vmin.f32 %v73, %v74
  %s76 = vtos %v75
  %v77 = vstv %s76
  %vm78 = vcmp.gt.f32.partialorder %v12, %v77
  %vm79 = vcmp.gt.f32.partialorder %v13, %v77
  %vm80 = vmand %vm15, %vm78
  %vm81 = vmand %vm16, %vm79
  %v82 = vsel %vm80, 1.0, 0.0
  %v83 = vsel %vm81, 1.0, 0.0
  %v84 = vadd.f32 %v82, %v83
  %85 = vadd.xlane.f32.xlu0 %v84
  %v86 = vpop.xlane.xlu0 %85
  %v87 = vrot.slane %v86, 4
  %v88 = vadd.f32 %v86, %v87
  %v89 = vrot.slane %v88, 2
  %v90 = vadd.f32 %v88, %v89
  %v91 = vrot.slane %v90, 1
  %v92 = vadd.f32 %v90, %v91
  %s93 = vtos %v92
  %v94 = vsel %vm80, %v12, 0.0
  %v95 = vsel %vm81, %v13, 0.0
  %v96 = vadd.f32 %v94, %v95
  %97 = vadd.xlane.f32.xlu0 %v96
  %v98 = vpop.xlane.xlu0 %97
  %v99 = vrot.slane %v98, 4
  %v100 = vadd.f32 %v98, %v99
  %v101 = vrot.slane %v100, 2
  %v102 = vadd.f32 %v100, %v101
  %v103 = vrot.slane %v102, 1
  %v104 = vadd.f32 %v102, %v103
  %s105 = vtos %v104
  %p106 = scmp.gt.f32.partialorder %s14, 0.0
  %s107 = ssub.f32 %s14, %s93
  %s108 = smul.f32 %s107, %s76
  %s109 = sadd.f32 %s105, %s108
  %s110 = scalar_select %p106, %s109, 0.0
  %v111 = vstv %s110
  %112 = vst [vmem:[%s2] sm:$0xff] %v111
  // Predicated region
  $region17: #{textbox_loss.3} parent=0 // pred_check
    _
  $region18: #{textbox_loss.3} parent=0 // pred_check_branch
    %114 = sbr.rel (0) target = $region20
  $region19: #{textbox_loss.3} parent=0 // pred_region
    _
  $region20: #{textbox_loss.3} parent=0 // pred_fallthru
    _
  // Predicated region
  $region21: #{textbox_loss.3} parent=0 // pred_check
    _
  $region22: #{textbox_loss.3} parent=0 // pred_check_branch
    %116 = sbr.rel (0) target = $region24
  $region23: #{textbox_loss.3} parent=0 // pred_region
    _
  $region24: #{textbox_loss.3} parent=0 // pred_fallthru
    _

// kernel: textbox_loss.2
$region0: #{textbox_loss.2}
  #allocation0 [shape = 'u32[]', space=smem, size = 0x4, offset = 0x4, fixed_abs, tag = 'smem constant byte address 0x4 - core index']
  #allocation1 [shape = 'u32[144,128]{1,0:T(1,128)}', space=vmem, size = 0x12000, scoped, tag = 'internal scratch']
  %s0 = inlined_call_operand.vmem [shape: f32[2,8,128], index: 0, kind: input, shape index: {}]
  %s1 = inlined_call_operand.vmem [shape: f32[2,14,8,128], index: 1, kind: input, shape index: {}]
  %s2 = inlined_call_operand.vmem [shape: f32[2,14,8,128], index: 2, kind: input, shape index: {}]
  %s3 = inlined_call_operand.vmem [shape: f32[2,8,128], index: 3, kind: output, shape index: {0}]
  %s4 = inlined_call_operand.vmem [shape: f32[2,1,24,128], index: 4, kind: output, shape index: {1}]
  %5 = xla_tuple %s3, %s4
  %s6 = sld [smem:[#allocation0]]
  $region53: #{textbox_loss.2} parent=0
    _
  %s8 = ssub.s32 1, %s6
  %s9 = scalar_select 0, %s8, %s6
  loop: start=0, step=1, limit=4
  $region2: #{textbox_loss.2} parent=0 // loop_pre_header
    _
  $region3: #{textbox_loss.2} parent=0 // loop_header
    %s11 = sphi 0, %s15
    %p12 = scmp.ge.s32.totalorder %s11, 4
    %s18 = sphi 0, %s30
    %s19 = sphi 0, %s26
    %s20 = sphi 0, %s18
    %s21 = sphi 0, %s19
    %s22 = sphi 0, %s20
    %s23 = sphi 0, %s21
    %s35 = sphi 0, %s37
    %s38 = sphi 0, %s35
    %s39 = sphi 0, %s38
    %s55 = sphi 0, %s39
    %s63 = sphi 0, %s65
    %s66 = sphi 0, %s63
    %s67 = sphi 0, %s66
    %s83 = sphi 0, %s67
    %s91 = sphi 0, %s93
    %s94 = sphi 0, %s91
    %s95 = sphi 0, %s94
    %s111 = sphi 0, %s95
    %s119 = sphi 0, %s121
    %s122 = sphi 0, %s119
    %s123 = sphi 0, %s122
    %s139 = sphi 0, %s123
    %s147 = sphi 0, %s149
    %s150 = sphi 0, %s147
    %s151 = sphi 0, %s150
    %s167 = sphi 0, %s151
  $region4: #{textbox_loss.2} parent=0 // loop_header_branch
    %14 = sbr.rel (%p12) target = $region8
  $region5: #{textbox_loss.2} parent=0 // loop_body
    %s16 = ssub.s32 %s11, 1
    %s17 = ssub.s32 %s11, 2
    %s24 = sadd.s32 1, %s19
    %p25 = scmp.ge.s32.totalorder %s24, 1
    %s26 = scalar_select %p25, 0, %s24
    %s27 = sadd.s32 1, %s18
    %s28 = scalar_select %p25, %s27, %s18
    %p29 = scmp.ge.s32.totalorder %s28, 2
    %s30 = scalar_select %p29, 0, %s28
    %s31 = ssub.s32 %s18, %s30
    %s32 = ssub.s32 %s19, %s26
    %s33 = sor.u32 %s31, %s32
    %p34 = scmp.eq.s32.totalorder %s33, 0
    %s36 = sadd.s32 %s35, 1
    %s37 = scalar_select %p34, %s35, %s36
    %p40 = pneg %p34
    %p41 = scmp.eq.s32.totalorder %s11, 1
    %p42 = por %p40, %p41
    %p43 = scmp.ne.s32.totalorder %s35, %s38
    %p44 = scmp.eq.s32.totalorder %s11, 0
    %p45 = por %p43, %p44
    %p46 = scmp.ne.s32.totalorder %s35, %s38
    %p47 = scmp.eq.s32.totalorder %s16, 1
    %p48 = por %p46, %p47
    %p49 = scmp.ne.s32.totalorder %s38, %s39
    %p50 = scmp.eq.s32.totalorder %s16, 0
    %p51 = por %p49, %p50
    %p52 = scmp.ne.s32.totalorder %s38, %s39
    %p53 = scmp.eq.s32.totalorder %s17, 1
    %p54 = por %p52, %p53
    %p56 = scmp.ne.s32.totalorder %s39, %s55
    %p57 = scmp.eq.s32.totalorder %s17, 0
    %p58 = por %p56, %p57
    %s59 = ssub.s32 %s18, %s30
    %s60 = ssub.s32 %s19, %s26
    %s61 = sor.u32 %s59, %s60
    %p62 = scmp.eq.s32.totalorder %s61, 0
    %s64 = sadd.s32 %s63, 1
    %s65 = scalar_select %p62, %s63, %s64
    %p68 = pneg %p62
    %p69 = scmp.eq.s32.totalorder %s11, 1
    %p70 = por %p68, %p69
    %p71 = scmp.ne.s32.totalorder %s63, %s66
    %p72 = scmp.eq.s32.totalorder %s11, 0
    %p73 = por %p71, %p72
    %p74 = scmp.ne.s32.totalorder %s63, %s66
    %p75 = scmp.eq.s32.totalorder %s16, 1
    %p76 = por %p74, %p75
    %p77 = scmp.ne.s32.totalorder %s66, %s67
    %p78 = scmp.eq.s32.totalorder %s16, 0
    %p79 = por %p77, %p78
    %p80 = scmp.ne.s32.totalorder %s66, %s67
    %p81 = scmp.eq.s32.totalorder %s17, 1
    %p82 = por %p80, %p81
    %p84 = scmp.ne.s32.totalorder %s67, %s83
    %p85 = scmp.eq.s32.totalorder %s17, 0
    %p86 = por %p84, %p85
    %s87 = ssub.s32 %s18, %s30
    %s88 = ssub.s32 %s19, %s26
    %s89 = sor.u32 %s87, %s88
    %p90 = scmp.eq.s32.totalorder %s89, 0
    %s92 = sadd.s32 %s91, 1
    %s93 = scalar_select %p90, %s91, %s92
    %p96 = pneg %p90
    %p97 = scmp.eq.s32.totalorder %s11, 1
    %p98 = por %p96, %p97
    %p99 = scmp.ne.s32.totalorder %s91, %s94
    %p100 = scmp.eq.s32.totalorder %s11, 0
    %p101 = por %p99, %p100
    %p102 = scmp.ne.s32.totalorder %s91, %s94
    %p103 = scmp.eq.s32.totalorder %s16, 1
    %p104 = por %p102, %p103
    %p105 = scmp.ne.s32.totalorder %s94, %s95
    %p106 = scmp.eq.s32.totalorder %s16, 0
    %p107 = por %p105, %p106
    %p108 = scmp.ne.s32.totalorder %s94, %s95
    %p109 = scmp.eq.s32.totalorder %s17, 1
    %p110 = por %p108, %p109
    %p112 = scmp.ne.s32.totalorder %s95, %s111
    %p113 = scmp.eq.s32.totalorder %s17, 0
    %p114 = por %p112, %p113
    %s115 = ssub.s32 %s18, %s30
    %s116 = ssub.s32 %s19, %s26
    %s117 = sor.u32 %s115, %s116
    %p118 = scmp.eq.s32.totalorder %s117, 0
    %s120 = sadd.s32 %s119, 1
    %s121 = scalar_select %p118, %s119, %s120
    %p124 = pneg %p118
    %p125 = scmp.eq.s32.totalorder %s11, 1
    %p126 = por %p124, %p125
    %p127 = scmp.ne.s32.totalorder %s119, %s122
    %p128 = scmp.eq.s32.totalorder %s11, 0
    %p129 = por %p127, %p128
    %p130 = scmp.ne.s32.totalorder %s119, %s122
    %p131 = scmp.eq.s32.totalorder %s16, 1
    %p132 = por %p130, %p131
    %p133 = scmp.ne.s32.totalorder %s122, %s123
    %p134 = scmp.eq.s32.totalorder %s16, 0
    %p135 = por %p133, %p134
    %p136 = scmp.ne.s32.totalorder %s122, %s123
    %p137 = scmp.eq.s32.totalorder %s17, 1
    %p138 = por %p136, %p137
    %p140 = scmp.ne.s32.totalorder %s123, %s139
    %p141 = scmp.eq.s32.totalorder %s17, 0
    %p142 = por %p140, %p141
    %s143 = ssub.s32 %s18, %s30
    %s144 = ssub.s32 %s19, %s26
    %s145 = sor.u32 %s143, %s144
    %p146 = scmp.eq.s32.totalorder %s145, 0
    %s148 = sadd.s32 %s147, 1
    %s149 = scalar_select %p146, %s147, %s148
    %p152 = pneg %p146
    %p153 = scmp.eq.s32.totalorder %s11, 1
    %p154 = por %p152, %p153
    %p155 = scmp.ne.s32.totalorder %s147, %s150
    %p156 = scmp.eq.s32.totalorder %s11, 0
    %p157 = por %p155, %p156
    %p158 = scmp.ne.s32.totalorder %s147, %s150
    %p159 = scmp.eq.s32.totalorder %s16, 1
    %p160 = por %p158, %p159
    %p161 = scmp.ne.s32.totalorder %s150, %s151
    %p162 = scmp.eq.s32.totalorder %s16, 0
    %p163 = por %p161, %p162
    %p164 = scmp.ne.s32.totalorder %s150, %s151
    %p165 = scmp.eq.s32.totalorder %s17, 1
    %p166 = por %p164, %p165
    %p168 = scmp.ne.s32.totalorder %s151, %s167
    %p169 = scmp.eq.s32.totalorder %s17, 0
    %p170 = por %p168, %p169
    %p171 = scmp.le.s32.totalorder 1, %s11
    %p172 = scmp.lt.s32.totalorder %s11, 3
    %p173 = pnand %p171, %p172
    %p174 = pneg %p173
    // Predicated region
    $region9: #{textbox_loss.2} parent=5 // pred_check
      _
    $region10: #{textbox_loss.2} parent=5 // pred_check_branch
      %176 = sbr.rel (%p173) target = $region12
    $region11: #{textbox_loss.2} parent=5 // pred_region
      %s177 = ssub.s32 %s11, 1
    $region12: #{textbox_loss.2} parent=5 // pred_fallthru
      _
    %p178 = scmp.lt.s32.totalorder %s11, 2
    // Predicated region
    $region13: #{textbox_loss.2} parent=5 // pred_check
      %p179 = pneg %p178
    $region14: #{textbox_loss.2} parent=5 // pred_check_branch
      %181 = sbr.rel (%p179) target = $region16
    $region15: #{textbox_loss.2} parent=5 // pred_region
      // Predicated region
      $region17: #{textbox_loss.2} parent=15 // pred_check
        %p182 = pneg %p45
      $region18: #{textbox_loss.2} parent=15 // pred_check_branch
        %184 = sbr.rel (%p182) target = $region20
      $region19: #{textbox_loss.2} parent=15 // pred_region
        %p185 = scmp.lt.s32.totalorder %s18, 1
        %s186 = scalar_select %p185, %s18, 1
        %p187 = scmp.lt.s32.totalorder %s19, 0
        %s188 = scalar_select %p187, %s19, 0
        %s189 = sadd.s32 %s188, %s186
        %s190 = smul.addr %s189, 8
        %s191 = scalar_lea.vmem %s0, %s190
      $region20: #{textbox_loss.2} parent=15 // pred_fallthru
        _
      // Predicated region
      $region21: #{textbox_loss.2} parent=15 // pred_check
        %p192 = pneg %p73
      $region22: #{textbox_loss.2} parent=15 // pred_check_branch
        %194 = sbr.rel (%p192) target = $region24
      $region23: #{textbox_loss.2} parent=15 // pred_region
        %p195 = scmp.lt.s32.totalorder %s18, 1
        %s196 = scalar_select %p195, %s18, 1
        %p197 = scmp.lt.s32.totalorder %s19, 0
        %s198 = scalar_select %p197, %s19, 0
        %s199 = smul.addr %s196, 14
        %s200 = sadd.s32 %s198, %s199
        %s201 = smul.addr %s200, 8
        %s202 = scalar_lea.vmem %s1, %s201
      $region24: #{textbox_loss.2} parent=15 // pred_fallthru
        _
      // Predicated region
      $region25: #{textbox_loss.2} parent=15 // pred_check
        %p203 = pneg %p101
      $region26: #{textbox_loss.2} parent=15 // pred_check_branch
        %205 = sbr.rel (%p203) target = $region28
      $region27: #{textbox_loss.2} parent=15 // pred_region
        %p206 = scmp.lt.s32.totalorder %s18, 1
        %s207 = scalar_select %p206, %s18, 1
        %p208 = scmp.lt.s32.totalorder %s19, 0
        %s209 = scalar_select %p208, %s19, 0
        %s210 = smul.addr %s207, 14
        %s211 = sadd.s32 %s209, %s210
        %s212 = smul.addr %s211, 8
        %s213 = scalar_lea.vmem %s2, %s212
      $region28: #{textbox_loss.2} parent=15 // pred_fallthru
        _
    $region16: #{textbox_loss.2} parent=5 // pred_fallthru
      _
    %p214 = scmp.le.s32.totalorder 1, %s11
    %p215 = scmp.lt.s32.totalorder %s11, 3
    %p216 = pnand %p214, %p215
    %p217 = pneg %p216
    // Predicated region
    $region29: #{textbox_loss.2} parent=5 // pred_check
      _
    $region30: #{textbox_loss.2} parent=5 // pred_check_branch
      %219 = sbr.rel (%p216) target = $region32
    $region31: #{textbox_loss.2} parent=5 // pred_region
      %s220 = ssub.s32 %s11, 1
      %p221 = scmp.lt.s32.totalorder %s20, 1
      %s222 = scalar_select %p221, %s20, 1
      %p223 = scmp.lt.s32.totalorder %s21, 0
      %s224 = scalar_select %p223, %s21, 0
      %s225 = sadd.s32 %s224, %s222
      %s226 = smul.addr %s225, 8
      %s227 = scalar_lea.vmem %s0, %s226
      %p228 = pneg %p51
      %p229 = pneg %p48
      %p230 = scmp.lt.s32.totalorder %s20, 1
      %s231 = scalar_select %p230, %s20, 1
      %p232 = scmp.lt.s32.totalorder %s21, 0
      %s233 = scalar_select %p232, %s21, 0
      %s234 = smul.addr %s231, 14
      %s235 = sadd.s32 %s233, %s234
      %s236 = smul.addr %s235, 8
      %s237 = scalar_lea.vmem %s1, %s236
      %p238 = pneg %p79
      %p239 = pneg %p76
      %p240 = scmp.lt.s32.totalorder %s20, 1
      %s241 = scalar_select %p240, %s20, 1
      %p242 = scmp.lt.s32.totalorder %s21, 0
      %s243 = scalar_select %p242, %s21, 0
      %s244 = smul.addr %s241, 14
      %s245 = sadd.s32 %s243, %s244
      %s246 = smul.addr %s245, 8
      %s247 = scalar_lea.vmem %s2, %s246
      %p248 = pneg %p107
      %p249 = pneg %p104
      %p250 = pneg %p135
      %p251 = pneg %p132
      %p252 = scmp.lt.s32.totalorder %s20, 1
      %s253 = scalar_select %p252, %s20, 1
      %p254 = scmp.lt.s32.totalorder %s21, 0
      %s255 = scalar_select %p254, %s21, 0
      %s256 = sadd.s32 %s255, %s253
      %s257 = smul.addr %s256, 8
      %s258 = scalar_lea.vmem %s3, %s257
      %p259 = pneg %p163
      %p260 = pneg %p160
      %p261 = scmp.lt.s32.totalorder %s20, 1
      %s262 = scalar_select %p261, %s20, 1
      %p263 = scmp.lt.s32.totalorder %s21, 0
      %s264 = scalar_select %p263, %s21, 0
      %s265 = smul.addr %s264, 3
      %s266 = smul.addr %s262, 3
      %s267 = sadd.s32 %s265, %s266
      %s268 = smul.addr %s267, 8
      %s269 = scalar_lea.vmem %s4, %s268
      %p270 = scmp.lt.s32.totalorder %s20, 1
      %s271 = scalar_select %p270, %s20, 1
      %p272 = scmp.lt.s32.totalorder %s21, 0
      %s273 = scalar_select %p272, %s21, 0
      %s274 = sadd.s32 %s273, %s271
      %s275 = smul.addr %s274, 8
      %s276 = scalar_lea.vmem %s0, %s275
      %p277 = scmp.lt.s32.totalorder %s20, 1
      %s278 = scalar_select %p277, %s20, 1
      %p279 = scmp.lt.s32.totalorder %s21, 0
      %s280 = scalar_select %p279, %s21, 0
      %s281 = smul.addr %s278, 14
      %s282 = sadd.s32 %s280, %s281
      %s283 = smul.addr %s282, 8
      %s284 = scalar_lea.vmem %s1, %s283
      %p285 = scmp.lt.s32.totalorder %s20, 1
      %s286 = scalar_select %p285, %s20, 1
      %p287 = scmp.lt.s32.totalorder %s21, 0
      %s288 = scalar_select %p287, %s21, 0
      %s289 = smul.addr %s286, 14
      %s290 = sadd.s32 %s288, %s289
      %s291 = smul.addr %s290, 8
      %s292 = scalar_lea.vmem %s2, %s291
      %p293 = scmp.lt.s32.totalorder %s20, 1
      %s294 = scalar_select %p293, %s20, 1
      %p295 = scmp.lt.s32.totalorder %s21, 0
      %s296 = scalar_select %p295, %s21, 0
      %s297 = sadd.s32 %s296, %s294
      %s298 = smul.addr %s297, 8
      %s299 = scalar_lea.vmem %s3, %s298
      %p300 = scmp.lt.s32.totalorder %s20, 1
      %s301 = scalar_select %p300, %s20, 1
      %p302 = scmp.lt.s32.totalorder %s21, 0
      %s303 = scalar_select %p302, %s21, 0
      %s304 = smul.addr %s303, 3
      %s305 = smul.addr %s301, 3
      %s306 = sadd.s32 %s304, %s305
      %s307 = smul.addr %s306, 8
      %s308 = scalar_lea.vmem %s4, %s307
      %v309 = vlaneseq
      %v310 = vshrl.u32 %v309, 7
      %v311 = vlaneseq
      %v312 = vand.u32 %v311, 127
      %s313 = smul.u32 %s21, 8
      %v314 = vstv %s313
      %v315 = vadd.s32 %v314, %v310
      %v316 = vmul.u32 %v315, 128
      %v317 = vadd.s32 %v316, %v312
      %vm318 = vcmp.lt.s32.totalorder %v317, 200
      %v319 = vld [vmem:[%s276] sm:$0xff]
      %vm320 = vcmp.gt.f32.partialorder %v319, 0.0
      %vm321 = vmand %vm318, %vm320
      %v322 = vld [vmem:[%s284] sm:$0xff]
      %v323 = vld [vmem:[%s292] sm:$0xff]
      %v324 = vsub.f32 %v322, %v323
      %v325 = vand.u32 2147483647, %v324
      %vm326 = vcmp.lt.f32.partialorder %v325, 1.0
      %v327 = vmul.f32 %v324, 0.5
      %v328 = vmul.f32 %v327, %v324
      %v329 = vsub.f32 %v325, 0.5
      %v330 = vsel %vm326, %v328, %v329
      %v331 = vadd.f32 %v330, 0.0
      %s332 = scalar_lea.vmem %s284, 8
      %v333 = vld [vmem:[%s332] sm:$0xff]
      %s334 = scalar_lea.vmem %s292, 8
      %v335 = vld [vmem:[%s334] sm:$0xff]
      %v336 = vsub.f32 %v333, %v335
      %v337 = vand.u32 2147483647, %v336
      %vm338 = vcmp.lt.f32.partialorder %v337, 1.0
      %v339 = vmul.f32 %v336, 0.5
      %v340 = vmul.f32 %v339, %v336
      %v341 = vsub.f32 %v337, 0.5
      %v342 = vsel %vm338, %v340, %v341
      %v343 = vadd.f32 %v331, %v342
      %s344 = scalar_lea.vmem %s284, 16
      %v345 = vld [vmem:[%s344] sm:$0xff]
      %s346 = scalar_lea.vmem %s292, 16
      %v347 = vld [vmem:[%s346] sm:$0xff]
      %v348 = vsub.f32 %v345, %v347
      %v349 = vand.u32 2147483647, %v348
      %vm350 = vcmp.lt.f32.partialorder %v349, 1.0
      %v351 = vmul.f32 %v348, 0.5
      %v352 = vmul.f32 %v351, %v348
      %v353 = vsub.f32 %v349, 0.5
      %v354 = vsel %vm350, %v352, %v353
      %v355 = vadd.f32 %v343, %v354
      %s356 = scalar_lea.vmem %s284, 24
      %v357 = vld [vmem:[%s356] sm:$0xff]
      %s358 = scalar_lea.vmem %s292, 24
      %v359 = vld [vmem:[%s358] sm:$0xff]
      %v360 = vsub.f32 %v357, %v359
      %v361 = vand.u32 2147483647, %v360
      %vm362 = vcmp.lt.f32.partialorder %v361, 1.0
      %v363 = vmul.f32 %v360, 0.5
      %v364 = vmul.f32 %v363, %v360
      %v365 = vsub.f32 %v361, 0.5
      %v366 = vsel %vm362, %v364, %v365
      %v367 = vadd.f32 %v355, %v366
      %s368 = scalar_lea.vmem %s284, 32
      %v369 = vld [vmem:[%s368] sm:$0xff]
      %s370 = scalar_lea.vmem %s292, 32
      %v371 = vld [vmem:[%s370] sm:$0xff]
      %v372 = vsub.f32 %v369, %v371
      %v373 = vand.u32 2147483647, %v372
      %vm374 = vcmp.lt.f32.partialorder %v373, 1.0
      %v375 = vmul.f32 %v372, 0.5
      %v376 = vmul.f32 %v375, %v372
      %v377 = vsub.f32 %v373, 0.5
      %v378 = vsel %vm374, %v376, %v377
      %v379 = vadd.f32 %v367, %v378
      %s380 = scalar_lea.vmem %s284, 40
      %v381 = vld [vmem:[%s380] sm:$0xff]
      %s382 = scalar_lea.vmem %s292, 40
      %v383 = vld [vmem:[%s382] sm:$0xff]
      %v384 = vsub.f32 %v381, %v383
      %v385 = vand.u32 2147483647, %v384
      %vm386 = vcmp.lt.f32.partialorder %v385, 1.0
      %v387 = vmul.f32 %v384, 0.5
      %v388 = vmul.f32 %v387, %v384
      %v389 = vsub.f32 %v385, 0.5
      %v390 = vsel %vm386, %v388, %v389
      %v391 = vadd.f32 %v379, %v390
      %s392 = scalar_lea.vmem %s284, 48
      %v393 = vld [vmem:[%s392] sm:$0xff]
      %s394 = scalar_lea.vmem %s292, 48
      %v395 = vld [vmem:[%s394] sm:$0xff]
      %v396 = vsub.f32 %v393, %v395
      %v397 = vand.u32 2147483647, %v396
      %vm398 = vcmp.lt.f32.partialorder %v397, 1.0
      %v399 = vmul.f32 %v396, 0.5
      %v400 = vmul.f32 %v399, %v396
      %v401 = vsub.f32 %v397, 0.5
      %v402 = vsel %vm398, %v400, %v401
      %v403 = vadd.f32 %v391, %v402
      %s404 = scalar_lea.vmem %s284, 56
      %v405 = vld [vmem:[%s404] sm:$0xff]
      %s406 = scalar_lea.vmem %s292, 56
      %v407 = vld [vmem:[%s406] sm:$0xff]
      %v408 = vsub.f32 %v405, %v407
      %v409 = vand.u32 2147483647, %v408
      %vm410 = vcmp.lt.f32.partialorder %v409, 1.0
      %v411 = vmul.f32 %v408, 0.5
      %v412 = vmul.f32 %v411, %v408
      %v413 = vsub.f32 %v409, 0.5
      %v414 = vsel %vm410, %v412, %v413
      %v415 = vadd.f32 %v403, %v414
      %s416 = scalar_lea.vmem %s284, 64
      %v417 = vld [vmem:[%s416] sm:$0xff]
      %s418 = scalar_lea.vmem %s292, 64
      %v419 = vld [vmem:[%s418] sm:$0xff]
      %v420 = vsub.f32 %v417, %v419
      %v421 = vand.u32 2147483647, %v420
      %vm422 = vcmp.lt.f32.partialorder %v421, 1.0
      %v423 = vmul.f32 %v420, 0.5
      %v424 = vmul.f32 %v423, %v420
      %v425 = vsub.f32 %v421, 0.5
      %v426 = vsel %vm422, %v424, %v425
      %v427 = vadd.f32 %v415, %v426
      %s428 = scalar_lea.vmem %s284, 72
      %v429 = vld [vmem:[%s428] sm:$0xff]
      %s430 = scalar_lea.vmem %s292, 72
      %v431 = vld [vmem:[%s430] sm:$0xff]
      %v432 = vsub.f32 %v429, %v431
      %v433 = vand.u32 2147483647, %v432
      %vm434 = vcmp.lt.f32.partialorder %v433, 1.0
      %v435 = vmul.f32 %v432, 0.5
      %v436 = vmul.f32 %v435, %v432
      %v437 = vsub.f32 %v433, 0.5
      %v438 = vsel %vm434, %v436, %v437
      %v439 = vadd.f32 %v427, %v438
      %s440 = scalar_lea.vmem %s284, 80
      %v441 = vld [vmem:[%s440] sm:$0xff]
      %s442 = scalar_lea.vmem %s292, 80
      %v443 = vld [vmem:[%s442] sm:$0xff]
      %v444 = vsub.f32 %v441, %v443
      %v445 = vand.u32 2147483647, %v444
      %vm446 = vcmp.lt.f32.partialorder %v445, 1.0
      %v447 = vmul.f32 %v444, 0.5
      %v448 = vmul.f32 %v447, %v444
      %v449 = vsub.f32 %v445, 0.5
      %v450 = vsel %vm446, %v448, %v449
      %v451 = vadd.f32 %v439, %v450
      %s452 = scalar_lea.vmem %s284, 88
      %v453 = vld [vmem:[%s452] sm:$0xff]
      %s454 = scalar_lea.vmem %s292, 88
      %v455 = vld [vmem:[%s454] sm:$0xff]
      %v456 = vsub.f32 %v453, %v455
      %v457 = vand.u32 2147483647, %v456
      %vm458 = vcmp.lt.f32.partialorder %v457, 1.0
      %v459 = vmul.f32 %v456, 0.5
      %v460 = vmul.f32 %v459, %v456
      %v461 = vsub.f32 %v457, 0.5
      %v462 = vsel %vm458, %v460, %v461
      %v463 = vadd.f32 %v451, %v462
      %s464 = scalar_lea.vmem %s284, 96
      %v465 = vld [vmem:[%s464] sm:$0xff]
      %s466 = scalar_lea.vmem %s284, 104
      %v467 = vld [vmem:[%s466] sm:$0xff]
      %s468 = scalar_lea.vmem %s292, 96
      %v469 = vld [vmem:[%s468] sm:$0xff]
      %s470 = scalar_lea.vmem %s292, 104
      %v471 = vld [vmem:[%s470] sm:$0xff]
      %v472 = vmax.f32 %v465, %v467
      %v473 = vsub.f32 %v465, %v472
      %v474 = vmul.f32 %v473, 1.442695
      %v475 = vpow.pop %v474
      %v476 = vsub.f32 %v467, %v472
      %v477 = vmul.f32 %v476, 1.442695
      %v478 = vpow.pop %v477
      %v479 = vadd.f32 %v475, %v478
      %v480 = vlog2.pop %v479
      %v481 = vmul.f32 %v480, 0.6931472
      %v482 = vadd.f32 %v472, %v481
      %v483 = vsub.f32 %v482, %v465
      %v484 = vmul.f32 %v469, %v483
      %v485 = vsub.f32 %v482, %v467
      %v486 = vmul.f32 %v471, %v485
      %v487 = vadd.f32 %v484, %v486
      %vm488 = vmxor %vm320, 1
      %vm489 = vmand %vm318, %vm488
      %v490 = vsel %vm489, %v487, -1.0
      %491 = vst [vmem:[%s299] sm:$0xff] %v490
      %v492 = vsel %vm321, %v463, 0.0
      %v493 = vadd.f32 %v492, 0.0
      %494 = vst [vmem:[%s308] sm:$0xff] %v493
      %v495 = vsel %vm321, %v487, 0.0
      %v496 = vadd.f32 %v495, 0.0
      %497 = vst [vmem:[%s308 + $0x8] sm:$0xff] %v496
      %v498 = vsel %vm321, 1.0, 0.0
      %v499 = vadd.f32 %v498, 0.0
      %500 = vst [vmem:[%s308 + $0x10] sm:$0xff] %v499
      %p501 = scmp.lt.s32.totalorder %s20, 1
      %s502 = scalar_select %p501, %s20, 1
      %p503 = scmp.lt.s32.totalorder %s21, 0
      %s504 = scalar_select %p503, %s21, 0
      %s505 = sadd.s32 %s504, %s502
      %s506 = smul.addr %s505, 8
      %s507 = scalar_lea.vmem %s3, %s506
      %p508 = scmp.lt.s32.totalorder %s20, 1
      %s509 = scalar_select %p508, %s20, 1
      %p510 = scmp.lt.s32.totalorder %s21, 0
      %s511 = scalar_select %p510, %s21, 0
      %s512 = smul.addr %s511, 3
      %s513 = smul.addr %s509, 3
      %s514 = sadd.s32 %s512, %s513
      %s515 = smul.addr %s514, 8
      %s516 = scalar_lea.vmem %s4, %s515
      // Predicated region
      $region33: #{textbox_loss.2} parent=31 // pred_check
        %p517 = pneg %p132
      $region34: #{textbox_loss.2} parent=31 // pred_check_branch
        %519 = sbr.rel (%p517) target = $region36
      $region35: #{textbox_loss.2} parent=31 // pred_region
        _
      $region36: #{textbox_loss.2} parent=31 // pred_fallthru
        _
      // Predicated region
      $region37: #{textbox_loss.2} parent=31 // pred_check
        %p520 = pneg %p160
      $region38: #{textbox_loss.2} parent=31 // pred_check_branch
        %522 = sbr.rel (%p520) target = $region40
      $region39: #{textbox_loss.2} parent=31 // pred_region
        _
      $region40: #{textbox_loss.2} parent=31 // pred_fallthru
        _
    $region32: #{textbox_loss.2} parent=5 // pred_fallthru
      _
    %p523 = scmp.le.s32.totalorder 2, %s11
    // Predicated region
    $region41: #{textbox_loss.2} parent=5 // pred_check
      %p524 = pneg %p523
    $region42: #{textbox_loss.2} parent=5 // pred_check_branch
      %526 = sbr.rel (%p524) target = $region44
    $region43: #{textbox_loss.2} parent=5 // pred_region
      %s527 = ssub.s32 %s11, 2
      // Predicated region
      $region45: #{textbox_loss.2} parent=43 // pred_check
        %p528 = pneg %p138
      $region46: #{textbox_loss.2} parent=43 // pred_check_branch
        %530 = sbr.rel (%p528) target = $region48
      $region47: #{textbox_loss.2} parent=43 // pred_region
        %p531 = scmp.lt.s32.totalorder %s22, 1
        %s532 = scalar_select %p531, %s22, 1
        %p533 = scmp.lt.s32.totalorder %s23, 0
        %s534 = scalar_select %p533, %s23, 0
        %s535 = sadd.s32 %s534, %s532
        %s536 = smul.addr %s535, 8
        %s537 = scalar_lea.vmem %s3, %s536
      $region48: #{textbox_loss.2} parent=43 // pred_fallthru
        _
      // Predicated region
      $region49: #{textbox_loss.2} parent=43 // pred_check
        %p538 = pneg %p166
      $region50: #{textbox_loss.2} parent=43 // pred_check_branch
        %540 = sbr.rel (%p538) target = $region52
      $region51: #{textbox_loss.2} parent=43 // pred_region
        %p541 = scmp.lt.s32.totalorder %s22, 1
        %s542 = scalar_select %p541, %s22, 1
        %p543 = scmp.lt.s32.totalorder %s23, 0
        %s544 = scalar_select %p543, %s23, 0
        %s545 = smul.addr %s544, 3
        %s546 = smul.addr %s542, 3
        %s547 = sadd.s32 %s545, %s546
        %s548 = smul.addr %s547, 8
        %s549 = scalar_lea.vmem %s4, %s548
      $region52: #{textbox_loss.2} parent=43 // pred_fallthru
        _
    $region44: #{textbox_loss.2} parent=5 // pred_fallthru
      _
  $region6: #{textbox_loss.2} parent=0 // loop_footer
    %s15 = sadd.s32 1, %s11
  $region7: #{textbox_loss.2} parent=0 // loop_footer_branch
    %10 = sbr.rel target = $region3
  $region8: #{textbox_loss.2} parent=0 // loop_exit
    _

</llo_original>
